<compile_context>
chip_gen: v5e
topology: v5e:2x2
jax: 0.10.0
libtpu: 0.0.40
codegen_flags: <defaults>
</compile_context>

<pallas_src>
import functools

import jax
import jax.numpy as jnp
import numpy as np
from jax.experimental import pallas as pl
from jax.experimental.pallas import tpu as pltpu


# ----------------------------------------------------------------------------
# Fused CBAM kernel: one grid step == Bt batch elements, everything in VMEM.
# ----------------------------------------------------------------------------
def _cbam_kernel(x_ref, w1t_ref, w2t_ref, wspm_ref, wspx_ref, bc_ref, o_ref):
    # x_ref   : (Bt, C, HW)  input tile, spatial dims flattened (lane-dense)
    # w1t_ref : (C, hid)     shared-MLP 1x1 conv #1 weight, pre-transposed
    # w2t_ref : (hid, C)     shared-MLP 1x1 conv #2 weight, pre-transposed
    # wspm_ref: (HW, HW)     Toeplitz matrix for the channel-mean map (bf16)
    # wspx_ref: (HW, HW)     Toeplitz matrix for the channel-max  map (bf16)
    # bc_ref  : (1,) SMEM    spatial conv bias
    # o_ref   : (Bt, C, HW)  output
    x = x_ref[...].astype(jnp.float32)                              # (Bt, C, HW)

    # ---- channel attention: sigmoid(MLP(avgpool) + MLP(maxpool)) -----------
    w1t = w1t_ref[...].astype(jnp.float32)                          # (C, hid)
    w2t = w2t_ref[...].astype(jnp.float32)                          # (hid, C)
    avg = jnp.mean(x, axis=2)                                       # (Bt, C)
    mx = jnp.max(x, axis=2)                                         # (Bt, C)
    h_avg = jnp.maximum(
        jnp.dot(avg, w1t, preferred_element_type=jnp.float32), 0.0)  # (Bt, hid)
    h_max = jnp.maximum(
        jnp.dot(mx, w1t, preferred_element_type=jnp.float32), 0.0)
    y = (jnp.dot(h_avg, w2t, preferred_element_type=jnp.float32)
         + jnp.dot(h_max, w2t, preferred_element_type=jnp.float32))  # (Bt, C)
    ca = jax.nn.sigmoid(y)                                          # (Bt, C)
    out1 = x * ca[:, :, None]                                       # (Bt, C, HW)

    # ---- spatial attention: sigmoid(conv7x7([mean_c, max_c])) --------------
    mean_map = jnp.mean(out1, axis=1)                               # (Bt, HW)
    max_map = jnp.max(out1, axis=1)                                 # (Bt, HW)
    conv = (jnp.dot(mean_map.astype(wspm_ref.dtype), wspm_ref[...],
                    preferred_element_type=jnp.float32)
            + jnp.dot(max_map.astype(wspx_ref.dtype), wspx_ref[...],
                      preferred_element_type=jnp.float32)
            + bc_ref[0])                                            # (Bt, HW)
    sa = jax.nn.sigmoid(conv)                                       # (Bt, HW)

    o_ref[...] = (out1 * sa[:, None, :]).astype(o_ref.dtype)        # lane-dense


# ----------------------------------------------------------------------------
# Host-side parameter preprocessing: fold the 7x7/pad=3 conv into two dense
# (HW, HW) matrices.  W?[(r, m), (i, j)] = wc[?, r-i+3, m-j+3] when |r-i| <= 3
# and |m-j| <= 3, else 0, so conv(cat(mean,max))[i,j] == mean @ Wm + max @ Wx.
# Index/mask tensors depend only on (H, W) and are cached; the per-call work
# is just the 98-element weight gather in numpy (weights are static here).
# ----------------------------------------------------------------------------
@functools.lru_cache(maxsize=None)
def _toeplitz_taps(H, W):
    ki = np.arange(H)[:, None] - np.arange(H)[None, :] + 3      # [r, i] -> r-i+3
    kj = np.arange(W)[:, None] - np.arange(W)[None, :] + 3      # [m, j] -> m-j+3
    valid = (((ki >= 0) & (ki <= 6))[:, :, None, None]
             & ((kj >= 0) & (kj <= 6))[None, None, :, :])       # (r, i, m, j)
    tap = (np.clip(ki, 0, 6)[:, :, None, None] * 7
           + np.clip(kj, 0, 6)[None, None, :, :])               # (r, i, m, j)
    return tap, valid.astype(np.float32)


def _build_spatial_weight_matrices(wc_flat, H, W, dtype=jnp.bfloat16):
    tap, valid = _toeplitz_taps(H, W)
    wc = np.asarray(wc_flat, dtype=np.float32).reshape(2, 49)
    wfull = wc[:, tap] * valid                                  # (2, r, i, m, j)
    wfull = np.transpose(wfull, (0, 1, 3, 2, 4))                # (2, r, m, i, j)
    wfull = wfull.reshape(2, H * W, H * W)
    return (jnp.asarray(wfull[0], dtype=dtype),                 # mean half
            jnp.asarray(wfull[1], dtype=dtype))                 # max  half


# ----------------------------------------------------------------------------
# CBAM forward (Pallas)
# ----------------------------------------------------------------------------
def cbam(x, params, *, num_blocks=1):
    """Fused CBAM forward.  Use num_blocks=2 on v7x (2 TensorCores/chip)."""
    B, C, H, W = x.shape
    HW = H * W
    hid = params["w1"].shape[0]
    assert B % num_blocks == 0
    Bt = B // num_blocks

    x_flat = x.reshape(B, C, HW)                                # lane-dense last dim
    w1_t = jnp.transpose(params["w1"]).astype(jnp.float32)      # (C, hid)
    w2_t = jnp.transpose(params["w2"]).astype(jnp.float32)      # (hid, C)
    wsp_mean, wsp_max = _build_spatial_weight_matrices(params["wc"], H, W)
    bc = params["bc"].astype(jnp.float32)

    # Honest VMEM budget: double-buffered x/out blocks + weights + headroom.
    x_block_bytes = Bt * C * HW * 4
    w_bytes = 2 * HW * HW * 2 + 2 * C * hid * 4
    est = 4 * x_block_bytes + 2 * w_bytes + (2 << 20)
    vmem_limit = int(min(64 << 20, max(8 << 20, 2 * est)))

    # TODO(synk): at ResNet-scale spatial maps the Toeplitz weight is
    # 2*(HW)^2 bf16 bytes (H=W=56 -> ~19.7 MB; doesn't fit v7x's smaller VMEM
    # once double-buffered): switch the spatial conv to a pltpu.roll-based
    # 98-tap formulation, add a C-tile grid axis marked "arbitrary" with the
    # channel mean/max accumulated in VMEM scratch, and single-buffer the
    # constant-index weight specs (pl.Buffered(1)).
    out_flat = pl.pallas_call(
        _cbam_kernel,
        out_shape=jax.ShapeDtypeStruct((B, C, HW), jnp.float32),
        grid=(num_blocks,),
        in_specs=[
            pl.BlockSpec((Bt, C, HW), lambda b: (b, 0, 0)),
            pl.BlockSpec((C, hid), lambda b: (0, 0)),
            pl.BlockSpec((hid, C), lambda b: (0, 0)),
            pl.BlockSpec((HW, HW), lambda b: (0, 0)),
            pl.BlockSpec((HW, HW), lambda b: (0, 0)),
            pl.BlockSpec(memory_space=pltpu.MemorySpace.SMEM),
        ],
        out_specs=pl.BlockSpec((Bt, C, HW), lambda b: (b, 0, 0)),
        compiler_params=pltpu.CompilerParams(
            dimension_semantics=("parallel",),
            vmem_limit_bytes=vmem_limit,
        ),
    )(x_flat, w1_t, w2_t, wsp_mean, wsp_max, bc)

    return out_flat.reshape(B, C, H, W)


# ----------------------------------------------------------------------------
# Pure-JAX reference (mirrors the PyTorch module) for correctness checking.
# ----------------------------------------------------------------------------
def cbam_ref(x, params):
    xf = x.astype(jnp.float32)
    avg = jnp.mean(xf, axis=(2, 3), keepdims=True)     # (B,C,1,1)
    mx = jnp.max(xf, axis=(2, 3), keepdims=True)
    w1, w2 = params["w1"], params["w2"]

    def mlp(p):
        h = jnp.einsum("oc,bcij->boij", w1, p)
        h = jnp.maximum(h, 0.0)
        return jnp.einsum("co,boij->bcij", w2, h)

    ca = jax.nn.sigmoid(mlp(avg) + mlp(mx))
    out1 = ca * xf
    amap = jnp.mean(out1, axis=1, keepdims=True)
    mmap = jnp.max(out1, axis=1, keepdims=True)
    cat = jnp.concatenate([amap, mmap], axis=1)        # (B,2,H,W)
    wc = params["wc"].reshape(1, 2, 7, 7)
    conv = jax.lax.conv_general_dilated(
        cat, wc, (1, 1), ((3, 3), (3, 3)),
        dimension_numbers=("NCHW", "OIHW", "NCHW"))
    sa = jax.nn.sigmoid(conv + params["bc"][0])
    return sa * out1


if __name__ == "__main__":
    B, C, H, W = 2, 32, 16, 16          # channel=32, ratio=16 -> hidden=2
    ratio = 16
    hid = C // ratio

    key = jax.random.PRNGKey(0)
    kx, k1, k2, k3, k4 = jax.random.split(key, 5)
    x = jax.random.normal(kx, (B, C, H, W), dtype=jnp.float32)
    params = {
        # Conv2d(C, C//ratio, 1, bias=False)  -> weight (hid, C)
        "w1": jax.random.normal(k1, (hid, C), dtype=jnp.float32) * 0.1,
        # Conv2d(C//ratio, C, 1, bias=False)  -> weight (C, hid)
        "w2": jax.random.normal(k2, (C, hid), dtype=jnp.float32) * 0.1,
        # Conv2d(2, 1, 7, padding=3)          -> weight (1,2,7,7) flat, bias (1,)
        "wc": jax.random.normal(k3, (2 * 7 * 7,), dtype=jnp.float32) * 0.05,
        "bc": jax.random.normal(k4, (1,), dtype=jnp.float32) * 0.05,
    }

    out = cbam(x, params)
    out = jax.block_until_ready(out)

    ref = cbam_ref(x, params)
    assert out.shape == (B, C, H, W)
    # Tolerance accounts for the bf16 Toeplitz spatial-conv weights (f32 acc).
    assert np.allclose(np.asarray(out), np.asarray(ref), rtol=2e-2, atol=2e-3)

    print("KERNEL_OK")
</pallas_src>

<mosaic_0001>
module attributes {stable_mosaic.version = 11 : i64} {
  func.func @_cbam_kernel(%arg0: i32, %arg1: memref<2x32x256xf32, #tpu.memory_space<vmem>>, %arg2: memref<32x2xf32, #tpu.memory_space<vmem>>, %arg3: memref<2x32xf32, #tpu.memory_space<vmem>>, %arg4: memref<256x256xbf16, #tpu.memory_space<vmem>>, %arg5: memref<256x256xbf16, #tpu.memory_space<vmem>>, %arg6: memref<1xf32, #tpu.memory_space<smem>>, %arg7: memref<2x32x256xf32, #tpu.memory_space<vmem>>) attributes {dimension_semantics = [#tpu.dimension_semantics<parallel>], iteration_bounds = array<i64: 1>, scalar_prefetch = 0 : i64, scratch_operands = 0 : i64, tpu.core_type = #tpu.core_type<tc>, window_params = [{transform_indices = @transform_0, window_bounds = array<i64: 2, 32, 256>}, {pipeline_mode = #tpu.pipeline_mode<synchronous>, transform_indices = @transform_1, window_bounds = array<i64: 32, 2>}, {pipeline_mode = #tpu.pipeline_mode<synchronous>, transform_indices = @transform_2, window_bounds = array<i64: 2, 32>}, {pipeline_mode = #tpu.pipeline_mode<synchronous>, transform_indices = @transform_3, window_bounds = array<i64: 256, 256>}, {pipeline_mode = #tpu.pipeline_mode<synchronous>, transform_indices = @transform_4, window_bounds = array<i64: 256, 256>}, {transform_indices = @transform_5, window_bounds = array<i64: 1>}, {transform_indices = @transform_6, window_bounds = array<i64: 2, 32, 256>}]} {
    %c0 = arith.constant 0 : index
    %c0_0 = arith.constant 0 : index
    %c0_1 = arith.constant 0 : index
    %0 = vector.load %arg1[%c0, %c0_0, %c0_1] : memref<2x32x256xf32, #tpu.memory_space<vmem>>, vector<2x32x256xf32>
    %c0_2 = arith.constant 0 : index
    %c0_3 = arith.constant 0 : index
    %1 = vector.load %arg2[%c0_2, %c0_3] : memref<32x2xf32, #tpu.memory_space<vmem>>, vector<32x2xf32>
    %c0_4 = arith.constant 0 : index
    %c0_5 = arith.constant 0 : index
    %2 = vector.load %arg3[%c0_4, %c0_5] : memref<2x32xf32, #tpu.memory_space<vmem>>, vector<2x32xf32>
    %cst = arith.constant dense<0.000000e+00> : vector<2x32xf32>
    %3 = vector.multi_reduction <add>, %0, %cst [2] : vector<2x32x256xf32> to vector<2x32xf32>
    %cst_6 = arith.constant 2.560000e+02 : f32
    %4 = vector.broadcast %cst_6 : f32 to vector<2x32xf32>
    %5 = arith.divf %3, %4 : vector<2x32xf32>
    %cst_7 = arith.constant dense<0xFF800000> : vector<2x32xf32>
    %6 = vector.multi_reduction <maximumf>, %0, %cst_7 [2] : vector<2x32x256xf32> to vector<2x32xf32>
    %cst_8 = arith.constant dense<0.000000e+00> : vector<2x2xf32>
    %7 = tpu.matmul %5, %1, %cst_8 {dimension_numbers = #tpu.dot_dimension_numbers<[1], [0], [0], [1], [0, 0, 1, 1], [], []>} : vector<2x32xf32>, vector<32x2xf32>, vector<2x2xf32> -> vector<2x2xf32>
    %cst_9 = arith.constant 0.000000e+00 : f32
    %8 = vector.broadcast %cst_9 : f32 to vector<2x2xf32>
    %9 = arith.maximumf %7, %8 : vector<2x2xf32>
    %cst_10 = arith.constant dense<0.000000e+00> : vector<2x2xf32>
    %10 = tpu.matmul %6, %1, %cst_10 {dimension_numbers = #tpu.dot_dimension_numbers<[1], [0], [0], [1], [0, 0, 1, 1], [], []>} : vector<2x32xf32>, vector<32x2xf32>, vector<2x2xf32> -> vector<2x2xf32>
    %cst_11 = arith.constant 0.000000e+00 : f32
    %11 = vector.broadcast %cst_11 : f32 to vector<2x2xf32>
    %12 = arith.maximumf %10, %11 : vector<2x2xf32>
    %cst_12 = arith.constant dense<0.000000e+00> : vector<2x32xf32>
    %13 = tpu.matmul %9, %2, %cst_12 {dimension_numbers = #tpu.dot_dimension_numbers<[1], [0], [0], [1], [0, 0, 1, 1], [], []>} : vector<2x2xf32>, vector<2x32xf32>, vector<2x32xf32> -> vector<2x32xf32>
    %cst_13 = arith.constant dense<0.000000e+00> : vector<2x32xf32>
    %14 = tpu.matmul %12, %2, %cst_13 {dimension_numbers = #tpu.dot_dimension_numbers<[1], [0], [0], [1], [0, 0, 1, 1], [], []>} : vector<2x2xf32>, vector<2x32xf32>, vector<2x32xf32> -> vector<2x32xf32>
    %15 = arith.addf %13, %14 : vector<2x32xf32>
    %16 = arith.negf %15 : vector<2x32xf32>
    %17 = math.exp %16 : vector<2x32xf32>
    %cst_14 = arith.constant 1.000000e+00 : f32
    %18 = vector.broadcast %cst_14 : f32 to vector<2x32xf32>
    %19 = arith.addf %18, %17 : vector<2x32xf32>
    %20 = arith.divf %18, %19 : vector<2x32xf32>
    %21 = vector.shape_cast %20 : vector<2x32xf32> to vector<2x32x1xf32>
    %22 = vector.broadcast %21 : vector<2x32x1xf32> to vector<2x32x256xf32>
    %23 = arith.mulf %0, %22 : vector<2x32x256xf32>
    %cst_15 = arith.constant dense<0.000000e+00> : vector<2x256xf32>
    %24 = vector.multi_reduction <add>, %23, %cst_15 [1] : vector<2x32x256xf32> to vector<2x256xf32>
    %cst_16 = arith.constant 3.200000e+01 : f32
    %25 = vector.broadcast %cst_16 : f32 to vector<2x256xf32>
    %26 = arith.divf %24, %25 : vector<2x256xf32>
    %cst_17 = arith.constant dense<0xFF800000> : vector<2x256xf32>
    %27 = vector.multi_reduction <maximumf>, %23, %cst_17 [1] : vector<2x32x256xf32> to vector<2x256xf32>
    %28 = arith.truncf %26 : vector<2x256xf32> to vector<2x256xbf16>
    %c0_18 = arith.constant 0 : index
    %c0_19 = arith.constant 0 : index
    %29 = vector.load %arg4[%c0_18, %c0_19] : memref<256x256xbf16, #tpu.memory_space<vmem>>, vector<256x256xbf16>
    %cst_20 = arith.constant dense<0.000000e+00> : vector<2x256xf32>
    %30 = tpu.matmul %28, %29, %cst_20 {dimension_numbers = #tpu.dot_dimension_numbers<[1], [0], [0], [1], [0, 0, 1, 1], [], []>} : vector<2x256xbf16>, vector<256x256xbf16>, vector<2x256xf32> -> vector<2x256xf32>
    %31 = arith.truncf %27 : vector<2x256xf32> to vector<2x256xbf16>
    %c0_21 = arith.constant 0 : index
    %c0_22 = arith.constant 0 : index
    %32 = vector.load %arg5[%c0_21, %c0_22] : memref<256x256xbf16, #tpu.memory_space<vmem>>, vector<256x256xbf16>
    %cst_23 = arith.constant dense<0.000000e+00> : vector<2x256xf32>
    %33 = tpu.matmul %31, %32, %cst_23 {dimension_numbers = #tpu.dot_dimension_numbers<[1], [0], [0], [1], [0, 0, 1, 1], [], []>} : vector<2x256xbf16>, vector<256x256xbf16>, vector<2x256xf32> -> vector<2x256xf32>
    %34 = arith.addf %30, %33 : vector<2x256xf32>
    %c0_24 = arith.constant 0 : index
    %35 = memref.load %arg6[%c0_24] : memref<1xf32, #tpu.memory_space<smem>>
    %36 = vector.broadcast %35 : f32 to vector<2x256xf32>
    %37 = arith.addf %34, %36 : vector<2x256xf32>
    %38 = arith.negf %37 : vector<2x256xf32>
    %39 = math.exp %38 : vector<2x256xf32>
    %cst_25 = arith.constant 1.000000e+00 : f32
    %40 = vector.broadcast %cst_25 : f32 to vector<2x256xf32>
    %41 = arith.addf %40, %39 : vector<2x256xf32>
    %42 = arith.divf %40, %41 : vector<2x256xf32>
    %43 = vector.shape_cast %42 : vector<2x256xf32> to vector<2x1x256xf32>
    %44 = vector.broadcast %43 : vector<2x1x256xf32> to vector<2x32x256xf32>
    %45 = arith.mulf %23, %44 : vector<2x32x256xf32>
    %c0_26 = arith.constant 0 : index
    %c0_27 = arith.constant 0 : index
    %c0_28 = arith.constant 0 : index
    %46 = vector.load %arg7[%c0_26, %c0_27, %c0_28] : memref<2x32x256xf32, #tpu.memory_space<vmem>>, vector<2x32x256xf32>
    tpu.vector_store %arg7[%c0_26, %c0_27, %c0_28], %45 {strides = array<i32>} : memref<2x32x256xf32, #tpu.memory_space<vmem>>, vector<2x32x256xf32>,
    return
  }
  func.func @transform_0(%arg0: i32) -> (i32, i32, i32) {
    %c0_i32 = arith.constant 0 : i32
    %c0_i32_0 = arith.constant 0 : i32
    %c0_i32_1 = arith.constant 0 : i32
    return %arg0, %c0_i32, %c0_i32_0 : i32, i32, i32
  }
  func.func @transform_1(%arg0: i32) -> (i32, i32) {
    %c0_i32 = arith.constant 0 : i32
    %c0_i32_0 = arith.constant 0 : i32
    %c0_i32_1 = arith.constant 0 : i32
    return %c0_i32, %c0_i32_0 : i32, i32
  }
  func.func @transform_2(%arg0: i32) -> (i32, i32) {
    %c0_i32 = arith.constant 0 : i32
    %c0_i32_0 = arith.constant 0 : i32
    %c0_i32_1 = arith.constant 0 : i32
    return %c0_i32, %c0_i32_0 : i32, i32
  }
  func.func @transform_3(%arg0: i32) -> (i32, i32) {
    %c0_i32 = arith.constant 0 : i32
    %c0_i32_0 = arith.constant 0 : i32
    %c0_i32_1 = arith.constant 0 : i32
    return %c0_i32, %c0_i32_0 : i32, i32
  }
  func.func @transform_4(%arg0: i32) -> (i32, i32) {
    %c0_i32 = arith.constant 0 : i32
    %c0_i32_0 = arith.constant 0 : i32
    %c0_i32_1 = arith.constant 0 : i32
    return %c0_i32, %c0_i32_0 : i32, i32
  }
  func.func @transform_5(%arg0: i32) -> i32 {
    %c0_i32 = arith.constant 0 : i32
    %c0_i32_0 = arith.constant 0 : i32
    return %c0_i32 : i32
  }
  func.func @transform_6(%arg0: i32) -> (i32, i32, i32) {
    %c0_i32 = arith.constant 0 : i32
    %c0_i32_0 = arith.constant 0 : i32
    %c0_i32_1 = arith.constant 0 : i32
    return %arg0, %c0_i32, %c0_i32_0 : i32, i32, i32
  }
}

</mosaic_0001>

<llo_original>
// kernel: tpu_custom_call.1
$region0: #{tpu_custom_call.1}
  #allocation0 [shape = 'u32[]', space=smem, size = 0x4, offset = 0x4, fixed_abs, tag = 'smem constant byte address 0x4 - core index']
  #allocation1 [shape = 'u32[72,128]{1,0:T(1,128)}', space=vmem, size = 0x9000, scoped, tag = 'internal scratch']
  #allocation2 [shape = 'f32[1]{0:T(128)S(6)}', space=smem, size = 0x200, scoped, tag = 'scoped memory for tpu_custom_call.1']
  %s0 = inlined_call_operand.hbm [shape: f32[2,32,256], index: 0, kind: input, shape index: {}]
  %s1 = inlined_call_operand.vmem [shape: f32[32,2], index: 1, kind: input, shape index: {}]
  %s2 = inlined_call_operand.vmem [shape: f32[2,32], index: 2, kind: input, shape index: {}]
  %s3 = inlined_call_operand.hbm [shape: bf16[256,256], index: 3, kind: input, shape index: {}]
  %s4 = inlined_call_operand.hbm [shape: bf16[256,256], index: 4, kind: input, shape index: {}]
  %s5 = inlined_call_operand.<no memory space> [shape: f32[1], index: 5, kind: input, shape index: {}]
  %s6 = inlined_call_operand.hbm [shape: f32[2,32,256], index: 6, kind: output, shape index: {}]
  %s7 = sld [smem:[#allocation0]]
  $region46: #{tpu_custom_call.1} parent=0
    _
  %s9 = ssub.s32 1, %s7
  %s10 = scalar_select 0, %s9, %s7
  %11 = sst [smem:[#allocation2]] %s5
  $region1: #{tpu_custom_call.1} parent=0
    #allocation3 [shape = 'u8[65536]{0}', space=vmem, size = 0x10000, scoped, tag = 'input window, operand 0, single buffered']
    #allocation4 [shape = 's32[1]{0}', space=sflag, size = 0x4, scoped, tag = 'scoped memory for tpu_custom_call.1']
    #allocation5 [shape = 's32[1]{0}', space=sflag, size = 0x4, scoped, tag = 'scoped memory for tpu_custom_call.1']
    #allocation6 [shape = 'u8[131072]{0}', space=vmem, size = 0x20000, scoped, tag = 'input window, operand 3, single buffered']
    #allocation7 [shape = 's32[1]{0}', space=sflag, size = 0x4, scoped, tag = 'scoped memory for tpu_custom_call.1']
    #allocation8 [shape = 'u8[131072]{0}', space=vmem, size = 0x20000, scoped, tag = 'input window, operand 4, single buffered']
    #allocation9 [shape = 'u8[65536]{0}', space=vmem, size = 0x10000, scoped, tag = 'output window, operand 0, single buffered']
    %12 = vsyncpa [#allocation4], 0
    %13 = vsyncpa [#allocation7], 0
    %14 = vsyncpa [#allocation5], 0
    // Predicated region
    $region2: #{tpu_custom_call.1} parent=1 // pred_check
      _
    $region3: #{tpu_custom_call.1} parent=1 // pred_check_branch
      %16 = sbr.rel (0) target = $region5
    $region4: #{tpu_custom_call.1} parent=1 // pred_region
      %18 = vsyncadd [#allocation4], 0
      %s19 = sshll.u32 %s0, 4
      %s20 = int_to_ptr.hbm [resolvable:$true] %s19
      %s21 = sshll.u32 [#allocation3], 4
      %s22 = int_to_ptr.vmem [resolvable:$true] %s21
      %27 = dma.hbm_to_vmem [thread:$0]  %s20, 2048, %s22, [#allocation4], 256, 256, 16
    $region5: #{tpu_custom_call.1} parent=1 // pred_fallthru
      _
    // Predicated region
    $region6: #{tpu_custom_call.1} parent=1 // pred_check
      _
    $region7: #{tpu_custom_call.1} parent=1 // pred_check_branch
      %29 = sbr.rel (0) target = $region9
    $region8: #{tpu_custom_call.1} parent=1 // pred_region
      _
    $region9: #{tpu_custom_call.1} parent=1 // pred_fallthru
      _
    // Predicated region
    $region10: #{tpu_custom_call.1} parent=1 // pred_check
      _
    $region11: #{tpu_custom_call.1} parent=1 // pred_check_branch
      %31 = sbr.rel (0) target = $region13
    $region12: #{tpu_custom_call.1} parent=1 // pred_region
      _
    $region13: #{tpu_custom_call.1} parent=1 // pred_fallthru
      _
    // Predicated region
    $region14: #{tpu_custom_call.1} parent=1 // pred_check
      _
    $region15: #{tpu_custom_call.1} parent=1 // pred_check_branch
      %33 = sbr.rel (0) target = $region17
    $region16: #{tpu_custom_call.1} parent=1 // pred_region
      %35 = vsyncadd [#allocation7], 0
      %s36 = sshll.u32 %s3, 4
      %s37 = int_to_ptr.hbm [resolvable:$true] %s36
      %s38 = sshll.u32 [#allocation6], 4
      %s39 = int_to_ptr.vmem [resolvable:$true] %s38
      %44 = dma.hbm_to_vmem [thread:$0]  %s37, 4096, %s39, [#allocation7], 128, 128, 8
    $region17: #{tpu_custom_call.1} parent=1 // pred_fallthru
      _
    // Predicated region
    $region18: #{tpu_custom_call.1} parent=1 // pred_check
      _
    $region19: #{tpu_custom_call.1} parent=1 // pred_check_branch
      %46 = sbr.rel (0) target = $region21
    $region20: #{tpu_custom_call.1} parent=1 // pred_region
      %48 = vsyncadd [#allocation7], 0
      %s49 = sshll.u32 %s4, 4
      %s50 = int_to_ptr.hbm [resolvable:$true] %s49
      %s51 = sshll.u32 [#allocation8], 4
      %s52 = int_to_ptr.vmem [resolvable:$true] %s51
      %57 = dma.hbm_to_vmem [thread:$0]  %s50, 4096, %s52, [#allocation7], 128, 128, 8
    $region21: #{tpu_custom_call.1} parent=1 // pred_fallthru
      _
    // Predicated region
    $region22: #{tpu_custom_call.1} parent=1 // pred_check
      _
    $region23: #{tpu_custom_call.1} parent=1 // pred_check_branch
      %59 = sbr.rel (0) target = $region25
    $region24: #{tpu_custom_call.1} parent=1 // pred_region
      _
    $region25: #{tpu_custom_call.1} parent=1 // pred_fallthru
      _
    // Predicated region
    $region26: #{tpu_custom_call.1} parent=1 // pred_check
      _
    $region27: #{tpu_custom_call.1} parent=1 // pred_check_branch
      %61 = sbr.rel (0) target = $region29
    $region28: #{tpu_custom_call.1} parent=1 // pred_region
      %63 = dma.done [#allocation4], 2048
    $region29: #{tpu_custom_call.1} parent=1 // pred_fallthru
      _
    // Predicated region
    $region30: #{tpu_custom_call.1} parent=1 // pred_check
      _
    $region31: #{tpu_custom_call.1} parent=1 // pred_check_branch
      %65 = sbr.rel (0) target = $region33
    $region32: #{tpu_custom_call.1} parent=1 // pred_region
      %67 = dma.done [#allocation7], 4096
    $region33: #{tpu_custom_call.1} parent=1 // pred_fallthru
      _
    // Predicated region
    $region34: #{tpu_custom_call.1} parent=1 // pred_check
      _
    $region35: #{tpu_custom_call.1} parent=1 // pred_check_branch
      %69 = sbr.rel (0) target = $region37
    $region36: #{tpu_custom_call.1} parent=1 // pred_region
      %71 = dma.done [#allocation7], 4096
    $region37: #{tpu_custom_call.1} parent=1 // pred_fallthru
      _
    %v72 = vld [vmem:[#allocation3] sm:$0xff]
    %v73 = vld [vmem:[#allocation3 + $0x8] sm:$0xff]
    %v74 = vld [vmem:[#allocation3 + $0x10] sm:$0xff]
    %v75 = vld [vmem:[#allocation3 + $0x18] sm:$0xff]
    %v76 = vld [vmem:[#allocation3 + $0x20] sm:$0xff]
    %v77 = vld [vmem:[#allocation3 + $0x28] sm:$0xff]
    %v78 = vld [vmem:[#allocation3 + $0x30] sm:$0xff]
    %v79 = vld [vmem:[#allocation3 + $0x38] sm:$0xff]
    %v80 = vld [vmem:[#allocation3 + $0x40] sm:$0xff]
    %v81 = vld [vmem:[#allocation3 + $0x48] sm:$0xff]
    %v82 = vld [vmem:[#allocation3 + $0x50] sm:$0xff]
    %v83 = vld [vmem:[#allocation3 + $0x58] sm:$0xff]
    %v84 = vld [vmem:[#allocation3 + $0x60] sm:$0xff]
    %v85 = vld [vmem:[#allocation3 + $0x68] sm:$0xff]
    %v86 = vld [vmem:[#allocation3 + $0x70] sm:$0xff]
    %v87 = vld [vmem:[#allocation3 + $0x78] sm:$0xff]
    %v88 = vld [vmem:[%s1] sm:$0xff]
    %v89 = vld [vmem:[%s1 + $0x8] sm:$0xff]
    %v90 = vld [vmem:[%s1 + $0x10] sm:$0xff]
    %v91 = vld [vmem:[%s1 + $0x18] sm:$0xff]
    %v92 = vld [vmem:[%s2] sm:$0x3]
    %v93 = vadd.f32 %v72, %v73
    %94 = vadd.xlane.f32.xlu0 %v93
    %v95 = vpop.xlane.xlu0 %94
    %v96 = vadd.f32 %v74, %v75
    %97 = vadd.xlane.f32.xlu0 %v96
    %v98 = vpop.xlane.xlu0 %97
    %v99 = vadd.f32 %v76, %v77
    %100 = vadd.xlane.f32.xlu0 %v99
    %v101 = vpop.xlane.xlu0 %100
    %v102 = vadd.f32 %v78, %v79
    %103 = vadd.xlane.f32.xlu0 %v102
    %v104 = vpop.xlane.xlu0 %103
    %v105 = vadd.f32 %v80, %v81
    %106 = vadd.xlane.f32.xlu0 %v105
    %v107 = vpop.xlane.xlu0 %106
    %v108 = vadd.f32 %v82, %v83
    %109 = vadd.xlane.f32.xlu0 %v108
    %v110 = vpop.xlane.xlu0 %109
    %v111 = vadd.f32 %v84, %v85
    %112 = vadd.xlane.f32.xlu0 %v111
    %v113 = vpop.xlane.xlu0 %112
    %v114 = vadd.f32 %v86, %v87
    %115 = vadd.xlane.f32.xlu0 %v114
    %v116 = vpop.xlane.xlu0 %115
    %v117 = vrcp.pop 256.0
    %v118 = vmul.f32 256.0, %v117
    %v119 = vsub.f32 1.0, %v118
    %v120 = vmul.f32 %v117, %v119
    %v121 = vadd.f32 %v117, %v120
    %vm122 = vweird.f32 %v117
    %v123 = vsel %vm122, %v117, %v121
    %v124 = vmul.f32 %v95, %v123
    %v125 = vmul.f32 %v98, %v123
    %v126 = vmul.f32 %v101, %v123
    %v127 = vmul.f32 %v104, %v123
    %v128 = vmul.f32 %v107, %v123
    %v129 = vmul.f32 %v110, %v123
    %v130 = vmul.f32 %v113, %v123
    %v131 = vmul.f32 %v116, %v123
    %v132 = vmax.f32 %v72, %v73
    %133 = vmax.xlane.f32.xlu0 %v132
    %v134 = vpop.xlane.xlu0 %133
    %v135 = vmax.f32 %v74, %v75
    %136 = vmax.xlane.f32.xlu0 %v135
    %v137 = vpop.xlane.xlu0 %136
    %v138 = vmax.f32 %v76, %v77
    %139 = vmax.xlane.f32.xlu0 %v138
    %v140 = vpop.xlane.xlu0 %139
    %v141 = vmax.f32 %v78, %v79
    %142 = vmax.xlane.f32.xlu0 %v141
    %v143 = vpop.xlane.xlu0 %142
    %v144 = vmax.f32 %v80, %v81
    %145 = vmax.xlane.f32.xlu0 %v144
    %v146 = vpop.xlane.xlu0 %145
    %v147 = vmax.f32 %v82, %v83
    %148 = vmax.xlane.f32.xlu0 %v147
    %v149 = vpop.xlane.xlu0 %148
    %v150 = vmax.f32 %v84, %v85
    %151 = vmax.xlane.f32.xlu0 %v150
    %v152 = vpop.xlane.xlu0 %151
    %v153 = vmax.f32 %v86, %v87
    %154 = vmax.xlane.f32.xlu0 %v153
    %v155 = vpop.xlane.xlu0 %154
    %v164 = vlaneseq
    %v165 = vand.u32 %v164, 127
    %v166 = vperm.slane %v124, %v165
    %v167 = vadd.s32 %v165, 4294967288
    %v168 = vperm.slane %v125, %v167
    %vm169 = vcmask 130112
    %v170 = vsel %vm169, %v168, %v166
    %v171 = vadd.s32 %v165, 4294967280
    %v172 = vperm.slane %v126, %v171
    %vm173 = vcmask 195712
    %v174 = vsel %vm173, %v172, %v170
    %v175 = vadd.s32 %v165, 4294967272
    %v176 = vperm.slane %v127, %v175
    %vm177 = vcmask 261312
    %v178 = vsel %vm177, %v176, %v174
    %v179 = vperm.slane %v128, %v165
    %v180 = vperm.slane %v129, %v167
    %v181 = vsel %vm169, %v180, %v179
    %v182 = vperm.slane %v130, %v171
    %v183 = vsel %vm173, %v182, %v181
    %v184 = vperm.slane %v131, %v175
    %v185 = vsel %vm177, %v184, %v183
    %vm186 = vcmask 1041409
    %v187 = vsel %vm186, %v185, %v178
    %vm188 = vcmask 261120
    %v189 = vsel %vm188, %v187, 0
    %191 = vmatpush.msra.mxu0 0.0
    %192 = vmatpush.msra.mxu0 0.0
    %193 = vmatpush.msra.mxu0 0.0
    %194 = vmatpush.msra.mxu0 0.0
    %195 = vmatpush.msra.mxu0 0.0
    %196 = vmatpush.msra.mxu0 0.0
    %197 = vmatpush.msra.mxu0 0.0
    %198 = vmatpush.msra.mxu0 0.0
    %199 = vmatpush.msra.mxu0 0.0
    %200 = vmatpush.msra.mxu0 0.0
    %201 = vmatpush.msra.mxu0 0.0
    %202 = vmatpush.msra.mxu0 0.0
    %203 = vmatpush.msra.mxu0 %v91
    %204 = vmatpush.msra.mxu0 %v90
    %205 = vmatpush.msra.mxu0 %v89
    %206 = vmatpush.msra.mxu0 %v88
    %207 = vmatmul.f32.gmra.mxu0 %v189
    %v208 = vpop.f32.mrf.mxu0
    %v209 = vadd.f32 0.0, %v208
    %210 = vdwg.mxu0
    %v211 = vmax.f32 %v209, 0.0
    %v220 = vperm.slane %v134, %v165
    %v221 = vperm.slane %v137, %v167
    %v222 = vsel %vm169, %v221, %v220
    %v223 = vperm.slane %v140, %v171
    %v224 = vsel %vm173, %v223, %v222
    %v225 = vperm.slane %v143, %v175
    %v226 = vsel %vm177, %v225, %v224
    %v227 = vperm.slane %v146, %v165
    %v228 = vperm.slane %v149, %v167
    %v229 = vsel %vm169, %v228, %v227
    %v230 = vperm.slane %v152, %v171
    %v231 = vsel %vm173, %v230, %v229
    %v232 = vperm.slane %v155, %v175
    %v233 = vsel %vm177, %v232, %v231
    %v234 = vsel %vm186, %v233, %v226
    %v235 = vsel %vm188, %v234, 0
    %237 = vmatpush.msra.mxu0 0.0
    %238 = vmatpush.msra.mxu0 0.0
    %239 = vmatpush.msra.mxu0 0.0
    %240 = vmatpush.msra.mxu0 0.0
    %241 = vmatpush.msra.mxu0 0.0
    %242 = vmatpush.msra.mxu0 0.0
    %243 = vmatpush.msra.mxu0 0.0
    %244 = vmatpush.msra.mxu0 0.0
    %245 = vmatpush.msra.mxu0 0.0
    %246 = vmatpush.msra.mxu0 0.0
    %247 = vmatpush.msra.mxu0 0.0
    %248 = vmatpush.msra.mxu0 0.0
    %249 = vmatpush.msra.mxu0 %v91
    %250 = vmatpush.msra.mxu0 %v90
    %251 = vmatpush.msra.mxu0 %v89
    %252 = vmatpush.msra.mxu0 %v88
    %253 = vmatmul.f32.gmra.mxu0 %v235
    %v254 = vpop.f32.mrf.mxu0
    %v255 = vadd.f32 0.0, %v254
    %256 = vdwg.mxu0
    %v257 = vmax.f32 %v255, 0.0
    %vm258 = vcmask 15360
    %v260 = vsel %vm258, %v257, 0
    %vm262 = vcmask 1041408
    %v264 = vsel %vm262, %v92, 0
    %266 = vmatpush.msra.mxu0 0.0
    %267 = vmatpush.msra.mxu0 0.0
    %268 = vmatpush.msra.mxu0 0.0
    %269 = vmatpush.msra.mxu0 0.0
    %270 = vmatpush.msra.mxu0 0.0
    %271 = vmatpush.msra.mxu0 0.0
    %272 = vmatpush.msra.mxu0 0.0
    %273 = vmatpush.msra.mxu0 0.0
    %274 = vmatpush.msra.mxu0 0.0
    %275 = vmatpush.msra.mxu0 0.0
    %276 = vmatpush.msra.mxu0 0.0
    %277 = vmatpush.msra.mxu0 0.0
    %278 = vmatpush.msra.mxu0 0.0
    %279 = vmatpush.msra.mxu0 0.0
    %280 = vmatpush.msra.mxu0 0.0
    %281 = vmatpush.msra.mxu0 %v264
    %282 = vmatmul.f32.gmra.mxu0 %v260
    %v283 = vpop.f32.mrf.mxu0
    %v284 = vadd.f32 0.0, %v283
    %285 = vdwg.mxu0
    %v287 = vsel %vm258, %v211, 0
    %289 = vmatpush.msra.mxu0 0.0
    %290 = vmatpush.msra.mxu0 0.0
    %291 = vmatpush.msra.mxu0 0.0
    %292 = vmatpush.msra.mxu0 0.0
    %293 = vmatpush.msra.mxu0 0.0
    %294 = vmatpush.msra.mxu0 0.0
    %295 = vmatpush.msra.mxu0 0.0
    %296 = vmatpush.msra.mxu0 0.0
    %297 = vmatpush.msra.mxu0 0.0
    %298 = vmatpush.msra.mxu0 0.0
    %299 = vmatpush.msra.mxu0 0.0
    %300 = vmatpush.msra.mxu0 0.0
    %301 = vmatpush.msra.mxu0 0.0
    %302 = vmatpush.msra.mxu0 0.0
    %303 = vmatpush.msra.mxu0 0.0
    %304 = vmatpush.msra.mxu0 %v264
    %305 = vmatmul.f32.gmra.mxu0 %v287
    %v306 = vpop.f32.mrf.mxu0
    %v307 = vadd.f32 %v284, %v306
    %308 = vdwg.mxu0
    %v309 = vxor.u32 %v307, 2147483648
    %v310 = vmul.f32 %v309, 1.442695
    %v311 = vpow.pop %v310
    %v312 = vadd.f32 %v311, 1.0
    %v313 = vrcp.pop %v312
    %v314 = vmul.f32 %v312, %v313
    %v315 = vsub.f32 1.0, %v314
    %v316 = vmul.f32 %v313, %v315
    %v317 = vadd.f32 %v313, %v316
    %vm318 = vweird.f32 %v312
    %vm319 = vweird.f32 %v313
    %vm320 = vmor %vm318, %vm319
    %v321 = vsel %vm320, %v313, %v317
    %v322 = vand.u32 2147483647, %v312
    %vm323 = vcmp.eq.f32.partialorder %v322, 8.507059e+37
    %v324 = vand.u32 %v312, 2147483648
    %v325 = vor.u32 1.1754944e-38, %v324
    %v326 = vsel %vm323, %v325, %v321
    %v327 = vmul.f32 1.0, %v326
    %v328 = vperm.slane %v327, 0
    %v329 = vlaneseq
    %v330 = vshrl.u32 %v329, 7
    %332 = vset.pattern.permute.xlu0 %v330
    %333 = vperm.xlu0 %332, %v328
    %v334 = vpop.permute.xlu0 %333
    %v335 = vlaneseq
    %v336 = vshrl.u32 %v335, 7
    %v337 = vadd.s32 %v336, 8
    %338 = vset.pattern.permute.xlu0 %v337
    %339 = vperm.xlu0 %338, %v328
    %v340 = vpop.permute.xlu0 %339
    %v341 = vlaneseq
    %v342 = vshrl.u32 %v341, 7
    %v343 = vadd.s32 %v342, 16
    %344 = vset.pattern.permute.xlu0 %v343
    %345 = vperm.xlu0 %344, %v328
    %v346 = vpop.permute.xlu0 %345
    %v347 = vlaneseq
    %v348 = vshrl.u32 %v347, 7
    %v349 = vadd.s32 %v348, 24
    %350 = vset.pattern.permute.xlu0 %v349
    %351 = vperm.xlu0 %350, %v328
    %v352 = vpop.permute.xlu0 %351
    %v353 = vperm.slane %v327, 1
    %v354 = vlaneseq
    %v355 = vshrl.u32 %v354, 7
    %357 = vset.pattern.permute.xlu0 %v355
    %358 = vperm.xlu0 %357, %v353
    %v359 = vpop.permute.xlu0 %358
    %v360 = vlaneseq
    %v361 = vshrl.u32 %v360, 7
    %v362 = vadd.s32 %v361, 8
    %363 = vset.pattern.permute.xlu0 %v362
    %364 = vperm.xlu0 %363, %v353
    %v365 = vpop.permute.xlu0 %364
    %v366 = vlaneseq
    %v367 = vshrl.u32 %v366, 7
    %v368 = vadd.s32 %v367, 16
    %369 = vset.pattern.permute.xlu0 %v368
    %370 = vperm.xlu0 %369, %v353
    %v371 = vpop.permute.xlu0 %370
    %v372 = vlaneseq
    %v373 = vshrl.u32 %v372, 7
    %v374 = vadd.s32 %v373, 24
    %375 = vset.pattern.permute.xlu0 %v374
    %376 = vperm.xlu0 %375, %v353
    %v377 = vpop.permute.xlu0 %376
    %v378 = vmul.f32 %v72, %v334
    %v379 = vmul.f32 %v73, %v334
    %v380 = vmul.f32 %v74, %v340
    %v381 = vmul.f32 %v75, %v340
    %v382 = vmul.f32 %v76, %v346
    %v383 = vmul.f32 %v77, %v346
    %v384 = vmul.f32 %v78, %v352
    %v385 = vmul.f32 %v79, %v352
    %v386 = vmul.f32 %v80, %v359
    %v387 = vmul.f32 %v81, %v359
    %v388 = vmul.f32 %v82, %v365
    %v389 = vmul.f32 %v83, %v365
    %v390 = vmul.f32 %v84, %v371
    %v391 = vmul.f32 %v85, %v371
    %v392 = vmul.f32 %v86, %v377
    %v393 = vmul.f32 %v87, %v377
    %v394 = vadd.f32 %v378, %v380
    %v395 = vadd.f32 %v394, %v382
    %v396 = vadd.f32 %v395, %v384
    %v397 = vrot.slane %v396, 4
    %v398 = vadd.f32 %v396, %v397
    %v399 = vrot.slane %v398, 2
    %v400 = vadd.f32 %v398, %v399
    %v401 = vrot.slane %v400, 1
    %v402 = vadd.f32 %v400, %v401
    %v403 = vadd.f32 %v379, %v381
    %v404 = vadd.f32 %v403, %v383
    %v405 = vadd.f32 %v404, %v385
    %v406 = vrot.slane %v405, 4
    %v407 = vadd.f32 %v405, %v406
    %v408 = vrot.slane %v407, 2
    %v409 = vadd.f32 %v407, %v408
    %v410 = vrot.slane %v409, 1
    %v411 = vadd.f32 %v409, %v410
    %v412 = vadd.f32 %v386, %v388
    %v413 = vadd.f32 %v412, %v390
    %v414 = vadd.f32 %v413, %v392
    %v415 = vrot.slane %v414, 4
    %v416 = vadd.f32 %v414, %v415
    %v417 = vrot.slane %v416, 2
    %v418 = vadd.f32 %v416, %v417
    %v419 = vrot.slane %v418, 1
    %v420 = vadd.f32 %v418, %v419
    %v421 = vadd.f32 %v387, %v389
    %v422 = vadd.f32 %v421, %v391
    %v423 = vadd.f32 %v422, %v393
    %v424 = vrot.slane %v423, 4
    %v425 = vadd.f32 %v423, %v424
    %v426 = vrot.slane %v425, 2
    %v427 = vadd.f32 %v425, %v426
    %v428 = vrot.slane %v427, 1
    %v429 = vadd.f32 %v427, %v428
    %v430 = vrcp.pop 32.0
    %v431 = vmul.f32 32.0, %v430
    %v432 = vsub.f32 1.0, %v431
    %v433 = vmul.f32 %v430, %v432
    %v434 = vadd.f32 %v430, %v433
    %vm435 = vweird.f32 %v430
    %v436 = vsel %vm435, %v430, %v434
    %v437 = vmul.f32 %v402, %v436
    %v438 = vmul.f32 %v411, %v436
    %v439 = vmul.f32 %v420, %v436
    %v440 = vmul.f32 %v429, %v436
    %v441 = vmax.f32 %v378, %v380
    %v442 = vmax.f32 %v441, %v382
    %v443 = vmax.f32 %v442, %v384
    %v444 = vrot.slane %v443, 4
    %v445 = vmax.f32 %v443, %v444
    %v446 = vrot.slane %v445, 2
    %v447 = vmax.f32 %v445, %v446
    %v448 = vrot.slane %v447, 1
    %v449 = vmax.f32 %v447, %v448
    %v450 = vmax.f32 %v379, %v381
    %v451 = vmax.f32 %v450, %v383
    %v452 = vmax.f32 %v451, %v385
    %v453 = vrot.slane %v452, 4
    %v454 = vmax.f32 %v452, %v453
    %v455 = vrot.slane %v454, 2
    %v456 = vmax.f32 %v454, %v455
    %v457 = vrot.slane %v456, 1
    %v458 = vmax.f32 %v456, %v457
    %v459 = vmax.f32 %v386, %v388
    %v460 = vmax.f32 %v459, %v390
    %v461 = vmax.f32 %v460, %v392
    %v462 = vrot.slane %v461, 4
    %v463 = vmax.f32 %v461, %v462
    %v464 = vrot.slane %v463, 2
    %v465 = vmax.f32 %v463, %v464
    %v466 = vrot.slane %v465, 1
    %v467 = vmax.f32 %v465, %v466
    %v468 = vmax.f32 %v387, %v389
    %v469 = vmax.f32 %v468, %v391
    %v470 = vmax.f32 %v469, %v393
    %v471 = vrot.slane %v470, 4
    %v472 = vmax.f32 %v470, %v471
    %v473 = vrot.slane %v472, 2
    %v474 = vmax.f32 %v472, %v473
    %v475 = vrot.slane %v474, 1
    %v476 = vmax.f32 %v474, %v475
    %v477 = vpack.c.bf16 %v437, %v437
    %v478 = vpack.c.bf16 %v438, %v438
    %v479 = vpack.c.bf16 %v439, %v439
    %v480 = vpack.c.bf16 %v440, %v440
    %v481 = vld [vmem:[#allocation6] sm:$0xff]
    %v482 = vld [vmem:[#allocation6 + $0x8] sm:$0xff]
    %v483 = vld [vmem:[#allocation6 + $0x10] sm:$0xff]
    %v484 = vld [vmem:[#allocation6 + $0x18] sm:$0xff]
    %v485 = vld [vmem:[#allocation6 + $0x20] sm:$0xff]
    %v486 = vld [vmem:[#allocation6 + $0x28] sm:$0xff]
    %v487 = vld [vmem:[#allocation6 + $0x30] sm:$0xff]
    %v488 = vld [vmem:[#allocation6 + $0x38] sm:$0xff]
    %v489 = vld [vmem:[#allocation6 + $0x40] sm:$0xff]
    %v490 = vld [vmem:[#allocation6 + $0x48] sm:$0xff]
    %v491 = vld [vmem:[#allocation6 + $0x50] sm:$0xff]
    %v492 = vld [vmem:[#allocation6 + $0x58] sm:$0xff]
    %v493 = vld [vmem:[#allocation6 + $0x60] sm:$0xff]
    %v494 = vld [vmem:[#allocation6 + $0x68] sm:$0xff]
    %v495 = vld [vmem:[#allocation6 + $0x70] sm:$0xff]
    %v496 = vld [vmem:[#allocation6 + $0x78] sm:$0xff]
    %v497 = vld [vmem:[#allocation6 + $0x80] sm:$0xff]
    %v498 = vld [vmem:[#allocation6 + $0x88] sm:$0xff]
    %v499 = vld [vmem:[#allocation6 + $0x90] sm:$0xff]
    %v500 = vld [vmem:[#allocation6 + $0x98] sm:$0xff]
    %v501 = vld [vmem:[#allocation6 + $0xa0] sm:$0xff]
    %v502 = vld [vmem:[#allocation6 + $0xa8] sm:$0xff]
    %v503 = vld [vmem:[#allocation6 + $0xb0] sm:$0xff]
    %v504 = vld [vmem:[#allocation6 + $0xb8] sm:$0xff]
    %v505 = vld [vmem:[#allocation6 + $0xc0] sm:$0xff]
    %v506 = vld [vmem:[#allocation6 + $0xc8] sm:$0xff]
    %v507 = vld [vmem:[#allocation6 + $0xd0] sm:$0xff]
    %v508 = vld [vmem:[#allocation6 + $0xd8] sm:$0xff]
    %v509 = vld [vmem:[#allocation6 + $0xe0] sm:$0xff]
    %v510 = vld [vmem:[#allocation6 + $0xe8] sm:$0xff]
    %v511 = vld [vmem:[#allocation6 + $0xf0] sm:$0xff]
    %v512 = vld [vmem:[#allocation6 + $0xf8] sm:$0xff]
    %v513 = vpack.c.bf16 %v449, %v449
    %v514 = vpack.c.bf16 %v458, %v458
    %v515 = vpack.c.bf16 %v467, %v467
    %v516 = vpack.c.bf16 %v476, %v476
    %v517 = vld [vmem:[#allocation8] sm:$0xff]
    %v518 = vld [vmem:[#allocation8 + $0x8] sm:$0xff]
    %v519 = vld [vmem:[#allocation8 + $0x10] sm:$0xff]
    %v520 = vld [vmem:[#allocation8 + $0x18] sm:$0xff]
    %v521 = vld [vmem:[#allocation8 + $0x20] sm:$0xff]
    %v522 = vld [vmem:[#allocation8 + $0x28] sm:$0xff]
    %v523 = vld [vmem:[#allocation8 + $0x30] sm:$0xff]
    %v524 = vld [vmem:[#allocation8 + $0x38] sm:$0xff]
    %v525 = vld [vmem:[#allocation8 + $0x40] sm:$0xff]
    %v526 = vld [vmem:[#allocation8 + $0x48] sm:$0xff]
    %v527 = vld [vmem:[#allocation8 + $0x50] sm:$0xff]
    %v528 = vld [vmem:[#allocation8 + $0x58] sm:$0xff]
    %v529 = vld [vmem:[#allocation8 + $0x60] sm:$0xff]
    %v530 = vld [vmem:[#allocation8 + $0x68] sm:$0xff]
    %v531 = vld [vmem:[#allocation8 + $0x70] sm:$0xff]
    %v532 = vld [vmem:[#allocation8 + $0x78] sm:$0xff]
    %v533 = vld [vmem:[#allocation8 + $0x80] sm:$0xff]
    %v534 = vld [vmem:[#allocation8 + $0x88] sm:$0xff]
    %v535 = vld [vmem:[#allocation8 + $0x90] sm:$0xff]
    %v536 = vld [vmem:[#allocation8 + $0x98] sm:$0xff]
    %v537 = vld [vmem:[#allocation8 + $0xa0] sm:$0xff]
    %v538 = vld [vmem:[#allocation8 + $0xa8] sm:$0xff]
    %v539 = vld [vmem:[#allocation8 + $0xb0] sm:$0xff]
    %v540 = vld [vmem:[#allocation8 + $0xb8] sm:$0xff]
    %v541 = vld [vmem:[#allocation8 + $0xc0] sm:$0xff]
    %v542 = vld [vmem:[#allocation8 + $0xc8] sm:$0xff]
    %v543 = vld [vmem:[#allocation8 + $0xd0] sm:$0xff]
    %v544 = vld [vmem:[#allocation8 + $0xd8] sm:$0xff]
    %v545 = vld [vmem:[#allocation8 + $0xe0] sm:$0xff]
    %v546 = vld [vmem:[#allocation8 + $0xe8] sm:$0xff]
    %v547 = vld [vmem:[#allocation8 + $0xf0] sm:$0xff]
    %v548 = vld [vmem:[#allocation8 + $0xf8] sm:$0xff]
    %v553 = vunpack.c.l.b16 %v513
    %v554 = vunpack.c.l.b16 %v514
    %v555 = vunpack.c.l.b16 %v515
    %v556 = vunpack.c.l.b16 %v516
    %v557 = vsel %vm186, %v555, %v553
    %v558 = vsel %vm186, %v556, %v554
    %v559 = vpack.c.b16 %v557, %v557
    %v560 = vpack.c.b16 %v558, %v558
    %v595 = vunpack.c.l.b16 %v517
    %v596 = vunpack.c.h.b16 %v517
    %v597 = vunpack.c.l.b16 %v518
    %v598 = vunpack.c.h.b16 %v518
    %v599 = vunpack.c.l.b16 %v519
    %v600 = vunpack.c.h.b16 %v519
    %v601 = vunpack.c.l.b16 %v520
    %v602 = vunpack.c.h.b16 %v520
    %v603 = vunpack.c.l.b16 %v521
    %v604 = vunpack.c.h.b16 %v521
    %v605 = vunpack.c.l.b16 %v522
    %v606 = vunpack.c.h.b16 %v522
    %v607 = vunpack.c.l.b16 %v523
    %v608 = vunpack.c.h.b16 %v523
    %v609 = vunpack.c.l.b16 %v524
    %v610 = vunpack.c.h.b16 %v524
    %v611 = vunpack.c.l.b16 %v525
    %v612 = vunpack.c.h.b16 %v525
    %v613 = vunpack.c.l.b16 %v526
    %v614 = vunpack.c.h.b16 %v526
    %v615 = vunpack.c.l.b16 %v527
    %v616 = vunpack.c.h.b16 %v527
    %v617 = vunpack.c.l.b16 %v528
    %v618 = vunpack.c.h.b16 %v528
    %v619 = vunpack.c.l.b16 %v529
    %v620 = vunpack.c.h.b16 %v529
    %v621 = vunpack.c.l.b16 %v530
    %v622 = vunpack.c.h.b16 %v530
    %v623 = vunpack.c.l.b16 %v531
    %v624 = vunpack.c.h.b16 %v531
    %v625 = vunpack.c.l.b16 %v532
    %v626 = vunpack.c.h.b16 %v532
    %v627 = vunpack.c.l.b16 %v533
    %v628 = vunpack.c.h.b16 %v533
    %v629 = vunpack.c.l.b16 %v534
    %v630 = vunpack.c.h.b16 %v534
    %v631 = vunpack.c.l.b16 %v535
    %v632 = vunpack.c.h.b16 %v535
    %v633 = vunpack.c.l.b16 %v536
    %v634 = vunpack.c.h.b16 %v536
    %v635 = vunpack.c.l.b16 %v537
    %v636 = vunpack.c.h.b16 %v537
    %v637 = vunpack.c.l.b16 %v538
    %v638 = vunpack.c.h.b16 %v538
    %v639 = vunpack.c.l.b16 %v539
    %v640 = vunpack.c.h.b16 %v539
    %v641 = vunpack.c.l.b16 %v540
    %v642 = vunpack.c.h.b16 %v540
    %v643 = vunpack.c.l.b16 %v541
    %v644 = vunpack.c.h.b16 %v541
    %v645 = vunpack.c.l.b16 %v542
    %v646 = vunpack.c.h.b16 %v542
    %v647 = vunpack.c.l.b16 %v543
    %v648 = vunpack.c.h.b16 %v543
    %v649 = vunpack.c.l.b16 %v544
    %v650 = vunpack.c.h.b16 %v544
    %v651 = vunpack.c.l.b16 %v545
    %v652 = vunpack.c.h.b16 %v545
    %v653 = vunpack.c.l.b16 %v546
    %v654 = vunpack.c.h.b16 %v546
    %v655 = vunpack.c.l.b16 %v547
    %v656 = vunpack.c.h.b16 %v547
    %v657 = vunpack.c.l.b16 %v548
    %v658 = vunpack.c.h.b16 %v548
    %v659 = vpack.c.b16 %v597, %v595
    %v660 = vpack.c.b16 %v598, %v596
    %v661 = vpack.c.b16 %v601, %v599
    %v662 = vpack.c.b16 %v602, %v600
    %v663 = vpack.c.b16 %v605, %v603
    %v664 = vpack.c.b16 %v606, %v604
    %v665 = vpack.c.b16 %v609, %v607
    %v666 = vpack.c.b16 %v610, %v608
    %v667 = vpack.c.b16 %v613, %v611
    %v668 = vpack.c.b16 %v614, %v612
    %v669 = vpack.c.b16 %v617, %v615
    %v670 = vpack.c.b16 %v618, %v616
    %v671 = vpack.c.b16 %v621, %v619
    %v672 = vpack.c.b16 %v622, %v620
    %v673 = vpack.c.b16 %v625, %v623
    %v674 = vpack.c.b16 %v626, %v624
    %v675 = vpack.c.b16 %v629, %v627
    %v676 = vpack.c.b16 %v630, %v628
    %v677 = vpack.c.b16 %v633, %v631
    %v678 = vpack.c.b16 %v634, %v632
    %v679 = vpack.c.b16 %v637, %v635
    %v680 = vpack.c.b16 %v638, %v636
    %v681 = vpack.c.b16 %v641, %v639
    %v682 = vpack.c.b16 %v642, %v640
    %v683 = vpack.c.b16 %v645, %v643
    %v684 = vpack.c.b16 %v646, %v644
    %v685 = vpack.c.b16 %v649, %v647
    %v686 = vpack.c.b16 %v650, %v648
    %v687 = vpack.c.b16 %v653, %v651
    %v688 = vpack.c.b16 %v654, %v652
    %v689 = vpack.c.b16 %v657, %v655
    %v690 = vpack.c.b16 %v658, %v656
    %723 = vmatpush.bf16.msra.mxu0 %v673
    %724 = vmatpush.bf16.msra.mxu0 %v671
    %725 = vmatpush.bf16.msra.mxu0 %v669
    %726 = vmatpush.bf16.msra.mxu0 %v667
    %727 = vmatpush.bf16.msra.mxu0 %v665
    %728 = vmatpush.bf16.msra.mxu0 %v663
    %729 = vmatpush.bf16.msra.mxu0 %v661
    %730 = vmatpush.bf16.msra.mxu0 %v659
    %731 = vmatmul.bf16.gmra.mxu0 %v559
    %v732 = vpop.f32.mrf.mxu0
    %v733 = vadd.f32 0.0, %v732
    %v734 = vpop.f32.mrf.mxu0
    %735 = vdwg.mxu0
    %736 = vmatpush.bf16.msra.mxu0 %v689
    %737 = vmatpush.bf16.msra.mxu0 %v687
    %738 = vmatpush.bf16.msra.mxu0 %v685
    %739 = vmatpush.bf16.msra.mxu0 %v683
    %740 = vmatpush.bf16.msra.mxu0 %v681
    %741 = vmatpush.bf16.msra.mxu0 %v679
    %742 = vmatpush.bf16.msra.mxu0 %v677
    %743 = vmatpush.bf16.msra.mxu0 %v675
    %744 = vmatmul.bf16.gmra.mxu0 %v560
    %v745 = vpop.f32.mrf.mxu0
    %v746 = vadd.f32 %v733, %v745
    %v747 = vpop.f32.mrf.mxu0
    %748 = vdwg.mxu0
    %749 = vmatpush.bf16.msra.mxu0 %v674
    %750 = vmatpush.bf16.msra.mxu0 %v672
    %751 = vmatpush.bf16.msra.mxu0 %v670
    %752 = vmatpush.bf16.msra.mxu0 %v668
    %753 = vmatpush.bf16.msra.mxu0 %v666
    %754 = vmatpush.bf16.msra.mxu0 %v664
    %755 = vmatpush.bf16.msra.mxu0 %v662
    %756 = vmatpush.bf16.msra.mxu0 %v660
    %757 = vmatmul.bf16.gmra.mxu0 %v559
    %v758 = vpop.f32.mrf.mxu0
    %v759 = vadd.f32 0.0, %v758
    %v760 = vpop.f32.mrf.mxu0
    %761 = vdwg.mxu0
    %762 = vmatpush.bf16.msra.mxu0 %v690
    %763 = vmatpush.bf16.msra.mxu0 %v688
    %764 = vmatpush.bf16.msra.mxu0 %v686
    %765 = vmatpush.bf16.msra.mxu0 %v684
    %766 = vmatpush.bf16.msra.mxu0 %v682
    %767 = vmatpush.bf16.msra.mxu0 %v680
    %768 = vmatpush.bf16.msra.mxu0 %v678
    %769 = vmatpush.bf16.msra.mxu0 %v676
    %770 = vmatmul.bf16.gmra.mxu0 %v560
    %v771 = vpop.f32.mrf.mxu0
    %v772 = vadd.f32 %v759, %v771
    %v773 = vpop.f32.mrf.mxu0
    %774 = vdwg.mxu0
    %v779 = vunpack.c.l.b16 %v477
    %v780 = vunpack.c.l.b16 %v478
    %v781 = vunpack.c.l.b16 %v479
    %v782 = vunpack.c.l.b16 %v480
    %v783 = vsel %vm186, %v781, %v779
    %v784 = vsel %vm186, %v782, %v780
    %v785 = vpack.c.b16 %v783, %v783
    %v786 = vpack.c.b16 %v784, %v784
    %v821 = vunpack.c.l.b16 %v481
    %v822 = vunpack.c.h.b16 %v481
    %v823 = vunpack.c.l.b16 %v482
    %v824 = vunpack.c.h.b16 %v482
    %v825 = vunpack.c.l.b16 %v483
    %v826 = vunpack.c.h.b16 %v483
    %v827 = vunpack.c.l.b16 %v484
    %v828 = vunpack.c.h.b16 %v484
    %v829 = vunpack.c.l.b16 %v485
    %v830 = vunpack.c.h.b16 %v485
    %v831 = vunpack.c.l.b16 %v486
    %v832 = vunpack.c.h.b16 %v486
    %v833 = vunpack.c.l.b16 %v487
    %v834 = vunpack.c.h.b16 %v487
    %v835 = vunpack.c.l.b16 %v488
    %v836 = vunpack.c.h.b16 %v488
    %v837 = vunpack.c.l.b16 %v489
    %v838 = vunpack.c.h.b16 %v489
    %v839 = vunpack.c.l.b16 %v490
    %v840 = vunpack.c.h.b16 %v490
    %v841 = vunpack.c.l.b16 %v491
    %v842 = vunpack.c.h.b16 %v491
    %v843 = vunpack.c.l.b16 %v492
    %v844 = vunpack.c.h.b16 %v492
    %v845 = vunpack.c.l.b16 %v493
    %v846 = vunpack.c.h.b16 %v493
    %v847 = vunpack.c.l.b16 %v494
    %v848 = vunpack.c.h.b16 %v494
    %v849 = vunpack.c.l.b16 %v495
    %v850 = vunpack.c.h.b16 %v495
    %v851 = vunpack.c.l.b16 %v496
    %v852 = vunpack.c.h.b16 %v496
    %v853 = vunpack.c.l.b16 %v497
    %v854 = vunpack.c.h.b16 %v497
    %v855 = vunpack.c.l.b16 %v498
    %v856 = vunpack.c.h.b16 %v498
    %v857 = vunpack.c.l.b16 %v499
    %v858 = vunpack.c.h.b16 %v499
    %v859 = vunpack.c.l.b16 %v500
    %v860 = vunpack.c.h.b16 %v500
    %v861 = vunpack.c.l.b16 %v501
    %v862 = vunpack.c.h.b16 %v501
    %v863 = vunpack.c.l.b16 %v502
    %v864 = vunpack.c.h.b16 %v502
    %v865 = vunpack.c.l.b16 %v503
    %v866 = vunpack.c.h.b16 %v503
    %v867 = vunpack.c.l.b16 %v504
    %v868 = vunpack.c.h.b16 %v504
    %v869 = vunpack.c.l.b16 %v505
    %v870 = vunpack.c.h.b16 %v505
    %v871 = vunpack.c.l.b16 %v506
    %v872 = vunpack.c.h.b16 %v506
    %v873 = vunpack.c.l.b16 %v507
    %v874 = vunpack.c.h.b16 %v507
    %v875 = vunpack.c.l.b16 %v508
    %v876 = vunpack.c.h.b16 %v508
    %v877 = vunpack.c.l.b16 %v509
    %v878 = vunpack.c.h.b16 %v509
    %v879 = vunpack.c.l.b16 %v510
    %v880 = vunpack.c.h.b16 %v510
    %v881 = vunpack.c.l.b16 %v511
    %v882 = vunpack.c.h.b16 %v511
    %v883 = vunpack.c.l.b16 %v512
    %v884 = vunpack.c.h.b16 %v512
    %v885 = vpack.c.b16 %v823, %v821
    %v886 = vpack.c.b16 %v824, %v822
    %v887 = vpack.c.b16 %v827, %v825
    %v888 = vpack.c.b16 %v828, %v826
    %v889 = vpack.c.b16 %v831, %v829
    %v890 = vpack.c.b16 %v832, %v830
    %v891 = vpack.c.b16 %v835, %v833
    %v892 = vpack.c.b16 %v836, %v834
    %v893 = vpack.c.b16 %v839, %v837
    %v894 = vpack.c.b16 %v840, %v838
    %v895 = vpack.c.b16 %v843, %v841
    %v896 = vpack.c.b16 %v844, %v842
    %v897 = vpack.c.b16 %v847, %v845
    %v898 = vpack.c.b16 %v848, %v846
    %v899 = vpack.c.b16 %v851, %v849
    %v900 = vpack.c.b16 %v852, %v850
    %v901 = vpack.c.b16 %v855, %v853
    %v902 = vpack.c.b16 %v856, %v854
    %v903 = vpack.c.b16 %v859, %v857
    %v904 = vpack.c.b16 %v860, %v858
    %v905 = vpack.c.b16 %v863, %v861
    %v906 = vpack.c.b16 %v864, %v862
    %v907 = vpack.c.b16 %v867, %v865
    %v908 = vpack.c.b16 %v868, %v866
    %v909 = vpack.c.b16 %v871, %v869
    %v910 = vpack.c.b16 %v872, %v870
    %v911 = vpack.c.b16 %v875, %v873
    %v912 = vpack.c.b16 %v876, %v874
    %v913 = vpack.c.b16 %v879, %v877
    %v914 = vpack.c.b16 %v880, %v878
    %v915 = vpack.c.b16 %v883, %v881
    %v916 = vpack.c.b16 %v884, %v882
    %949 = vmatpush.bf16.msra.mxu0 %v899
    %950 = vmatpush.bf16.msra.mxu0 %v897
    %951 = vmatpush.bf16.msra.mxu0 %v895
    %952 = vmatpush.bf16.msra.mxu0 %v893
    %953 = vmatpush.bf16.msra.mxu0 %v891
    %954 = vmatpush.bf16.msra.mxu0 %v889
    %955 = vmatpush.bf16.msra.mxu0 %v887
    %956 = vmatpush.bf16.msra.mxu0 %v885
    %957 = vmatmul.bf16.gmra.mxu0 %v785
    %v958 = vpop.f32.mrf.mxu0
    %v959 = vadd.f32 %v746, %v958
    %v960 = vpop.f32.mrf.mxu0
    %961 = vdwg.mxu0
    %962 = vmatpush.bf16.msra.mxu0 %v915
    %963 = vmatpush.bf16.msra.mxu0 %v913
    %964 = vmatpush.bf16.msra.mxu0 %v911
    %965 = vmatpush.bf16.msra.mxu0 %v909
    %966 = vmatpush.bf16.msra.mxu0 %v907
    %967 = vmatpush.bf16.msra.mxu0 %v905
    %968 = vmatpush.bf16.msra.mxu0 %v903
    %969 = vmatpush.bf16.msra.mxu0 %v901
    %970 = vmatmul.bf16.gmra.mxu0 %v786
    %v971 = vpop.f32.mrf.mxu0
    %v972 = vadd.f32 %v959, %v971
    %v973 = vpop.f32.mrf.mxu0
    %974 = vdwg.mxu0
    %975 = vmatpush.bf16.msra.mxu0 %v900
    %976 = vmatpush.bf16.msra.mxu0 %v898
    %977 = vmatpush.bf16.msra.mxu0 %v896
    %978 = vmatpush.bf16.msra.mxu0 %v894
    %979 = vmatpush.bf16.msra.mxu0 %v892
    %980 = vmatpush.bf16.msra.mxu0 %v890
    %981 = vmatpush.bf16.msra.mxu0 %v888
    %982 = vmatpush.bf16.msra.mxu0 %v886
    %983 = vmatmul.bf16.gmra.mxu0 %v785
    %v984 = vpop.f32.mrf.mxu0
    %v985 = vadd.f32 %v772, %v984
    %v986 = vpop.f32.mrf.mxu0
    %987 = vdwg.mxu0
    %988 = vmatpush.bf16.msra.mxu0 %v916
    %989 = vmatpush.bf16.msra.mxu0 %v914
    %990 = vmatpush.bf16.msra.mxu0 %v912
    %991 = vmatpush.bf16.msra.mxu0 %v910
    %992 = vmatpush.bf16.msra.mxu0 %v908
    %993 = vmatpush.bf16.msra.mxu0 %v906
    %994 = vmatpush.bf16.msra.mxu0 %v904
    %995 = vmatpush.bf16.msra.mxu0 %v902
    %996 = vmatmul.bf16.gmra.mxu0 %v786
    %v997 = vpop.f32.mrf.mxu0
    %v998 = vadd.f32 %v985, %v997
    %v999 = vpop.f32.mrf.mxu0
    %1000 = vdwg.mxu0
    %s1001 = sld [smem:[#allocation2]]
    %v1002 = vstv %s1001
    %v1003 = vadd.f32 %v972, %v1002
    %v1004 = vadd.f32 %v998, %v1002
    %v1005 = vxor.u32 %v1003, 2147483648
    %v1006 = vxor.u32 %v1004, 2147483648
    %v1007 = vmul.f32 %v1005, 1.442695
    %v1008 = vpow.pop %v1007
    %v1009 = vmul.f32 %v1006, 1.442695
    %v1010 = vpow.pop %v1009
    %v1011 = vadd.f32 %v1008, 1.0
    %v1012 = vadd.f32 %v1010, 1.0
    %v1013 = vrcp.pop %v1011
    %v1014 = vmul.f32 %v1011, %v1013
    %v1015 = vsub.f32 1.0, %v1014
    %v1016 = vmul.f32 %v1013, %v1015
    %v1017 = vadd.f32 %v1013, %v1016
    %vm1018 = vweird.f32 %v1011
    %vm1019 = vweird.f32 %v1013
    %vm1020 = vmor %vm1018, %vm1019
    %v1021 = vsel %vm1020, %v1013, %v1017
    %v1022 = vand.u32 2147483647, %v1011
    %vm1023 = vcmp.eq.f32.partialorder %v1022, 8.507059e+37
    %v1024 = vand.u32 %v1011, 2147483648
    %v1025 = vor.u32 1.1754944e-38, %v1024
    %v1026 = vsel %vm1023, %v1025, %v1021
    %v1027 = vmul.f32 1.0, %v1026
    %v1028 = vrcp.pop %v1012
    %v1029 = vmul.f32 %v1012, %v1028
    %v1030 = vsub.f32 1.0, %v1029
    %v1031 = vmul.f32 %v1028, %v1030
    %v1032 = vadd.f32 %v1028, %v1031
    %vm1033 = vweird.f32 %v1012
    %vm1034 = vweird.f32 %v1028
    %vm1035 = vmor %vm1033, %vm1034
    %v1036 = vsel %vm1035, %v1028, %v1032
    %v1037 = vand.u32 2147483647, %v1012
    %vm1038 = vcmp.eq.f32.partialorder %v1037, 8.507059e+37
    %v1039 = vand.u32 %v1012, 2147483648
    %v1040 = vor.u32 1.1754944e-38, %v1039
    %v1041 = vsel %vm1038, %v1040, %v1036
    %v1042 = vmul.f32 1.0, %v1041
    %v1045 = vrot.slane %v1042, 7
    %vm1046 = vcmask 1040384
    %v1047 = vsel %vm1046, %v1027, %v1045
    %v1048 = vsel %vm186, %v1027, %v1045
    %v1049 = vrot.slane %v1048, 1
    %v1050 = vperm.slane %v1047, 0
    %v1051 = vperm.slane %v1047, 1
    %v1052 = vperm.slane %v1049, 0
    %v1053 = vperm.slane %v1049, 1
    %v1058 = vmul.f32 %v378, %v1050
    %v1059 = vmul.f32 %v379, %v1051
    %v1060 = vmul.f32 %v380, %v1050
    %v1061 = vmul.f32 %v381, %v1051
    %v1062 = vmul.f32 %v382, %v1050
    %v1063 = vmul.f32 %v383, %v1051
    %v1064 = vmul.f32 %v384, %v1050
    %v1065 = vmul.f32 %v385, %v1051
    %v1066 = vmul.f32 %v386, %v1052
    %v1067 = vmul.f32 %v387, %v1053
    %v1068 = vmul.f32 %v388, %v1052
    %v1069 = vmul.f32 %v389, %v1053
    %v1070 = vmul.f32 %v390, %v1052
    %v1071 = vmul.f32 %v391, %v1053
    %v1072 = vmul.f32 %v392, %v1052
    %v1073 = vmul.f32 %v393, %v1053
    %1074 = vst [vmem:[#allocation9] sm:$0xff] %v1058
    %1075 = vst [vmem:[#allocation9 + $0x8] sm:$0xff] %v1059
    %1076 = vst [vmem:[#allocation9 + $0x10] sm:$0xff] %v1060
    %1077 = vst [vmem:[#allocation9 + $0x18] sm:$0xff] %v1061
    %1078 = vst [vmem:[#allocation9 + $0x20] sm:$0xff] %v1062
    %1079 = vst [vmem:[#allocation9 + $0x28] sm:$0xff] %v1063
    %1080 = vst [vmem:[#allocation9 + $0x30] sm:$0xff] %v1064
    %1081 = vst [vmem:[#allocation9 + $0x38] sm:$0xff] %v1065
    %1082 = vst [vmem:[#allocation9 + $0x40] sm:$0xff] %v1066
    %1083 = vst [vmem:[#allocation9 + $0x48] sm:$0xff] %v1067
    %1084 = vst [vmem:[#allocation9 + $0x50] sm:$0xff] %v1068
    %1085 = vst [vmem:[#allocation9 + $0x58] sm:$0xff] %v1069
    %1086 = vst [vmem:[#allocation9 + $0x60] sm:$0xff] %v1070
    %1087 = vst [vmem:[#allocation9 + $0x68] sm:$0xff] %v1071
    %1088 = vst [vmem:[#allocation9 + $0x70] sm:$0xff] %v1072
    %1089 = vst [vmem:[#allocation9 + $0x78] sm:$0xff] %v1073
    // Predicated region
    $region38: #{tpu_custom_call.1} parent=1 // pred_check
      _
    $region39: #{tpu_custom_call.1} parent=1 // pred_check_branch
      %1091 = sbr.rel (0) target = $region41
    $region40: #{tpu_custom_call.1} parent=1 // pred_region
      %1093 = vsyncadd [#allocation5], 0
      %s1094 = sshll.u32 [#allocation9], 4
      %s1095 = int_to_ptr.vmem [resolvable:$true] %s1094
      %s1096 = sshll.u32 %s6, 4
      %s1097 = int_to_ptr.hbm [resolvable:$true] %s1096
      %1102 = dma.vmem_to_hbm [thread:$0]  %s1095, 2048, %s1097, [#allocation5], 256, 256, 16
    $region41: #{tpu_custom_call.1} parent=1 // pred_fallthru
      _
    // Predicated region
    $region42: #{tpu_custom_call.1} parent=1 // pred_check
      _
    $region43: #{tpu_custom_call.1} parent=1 // pred_check_branch
      %1104 = sbr.rel (0) target = $region45
    $region44: #{tpu_custom_call.1} parent=1 // pred_region
      %1106 = dma.done [#allocation5], 2048
    $region45: #{tpu_custom_call.1} parent=1 // pred_fallthru
      _
    %1107 = vsyncpa [#allocation4], 1
    %1108 = vsyncpa [#allocation7], 1
    %1109 = vsyncpa [#allocation5], 1

</llo_original>
